<compile_context>
chip_gen: v7x
topology: tpu7x:2x2x1
jax: 0.10.0
libtpu: 0.0.40
codegen_flags: <defaults>
</compile_context>

<pallas_src>
import functools

import jax
import jax.numpy as jnp
from jax.experimental import pallas as pl
from jax.experimental.pallas import tpu as pltpu

LOG_STD_MIN = -10.0
LOG_STD_MAX = 2.0
_BIG = float(jnp.finfo(jnp.float32).max)


def _transition_kernel(x_ref, w1_ref, b1_ref, w2_ref, b2_ref,
                       wh_ref, bh_ref, lo_ref, hi_ref, out_ref):
    # Layer 1:  h1 = relu(W1 @ x + b1)        (h1, tb)
    h = jnp.dot(w1_ref[...], x_ref[...], preferred_element_type=jnp.float32)
    h = jnp.maximum(h + b1_ref[...], 0.0).astype(w2_ref.dtype)

    # Layer 2:  h2 = relu(W2 @ h1 + b2)       (h2, tb)
    h = jnp.dot(w2_ref[...], h, preferred_element_type=jnp.float32)
    h = jnp.maximum(h + b2_ref[...], 0.0).astype(wh_ref.dtype)

    # Fused heads: [mean ; log_std] = Wh @ h + bh   (2*out_dim, tb)
    head = jnp.dot(wh_ref[...], h, preferred_element_type=jnp.float32) + bh_ref[...]

    # Per-row clamp vectors: rows [0, out_dim) are (-BIG, +BIG) -> no-op for mean;
    # rows [out_dim, 2*out_dim) are (LOG_STD_MIN, LOG_STD_MAX).
    out_ref[...] = jnp.minimum(jnp.maximum(head, lo_ref[...]),
                               hi_ref[...]).astype(out_ref.dtype)


def pack_params(params, obs_dim, compute_dtype=jnp.float32):
    """Transpose weights to (out, in), fuse heads, build clamp vectors (host-side, once)."""
    w1, b1, w2, b2, wm, bm, ws, bs = params
    out_dim = wm.shape[1]

    w1_t = w1.T.astype(compute_dtype)                                 # (h1, in_dim)
    w2_t = w2.T.astype(compute_dtype)                                 # (h2, h1)
    wh_t = jnp.concatenate([wm, ws], axis=1).T.astype(compute_dtype)  # (2*out_dim, h2)

    b1_t = b1.reshape(-1, 1).astype(jnp.float32)                      # (h1, 1)
    b2_t = b2.reshape(-1, 1).astype(jnp.float32)                      # (h2, 1)
    bh_t = jnp.concatenate([bm, bs], axis=1).reshape(-1, 1).astype(jnp.float32)

    lo = jnp.concatenate([jnp.full((out_dim, 1), -_BIG, jnp.float32),
                          jnp.full((out_dim, 1), LOG_STD_MIN, jnp.float32)], axis=0)
    hi = jnp.concatenate([jnp.full((out_dim, 1), _BIG, jnp.float32),
                          jnp.full((out_dim, 1), LOG_STD_MAX, jnp.float32)], axis=0)

    return (w1_t, b1_t, w2_t, b2_t, wh_t, bh_t, lo, hi)


@functools.partial(jax.jit, static_argnames=("tile_b",))
def transition_forward(obs, act, packed, *, tile_b=2048):
    """obs: (B, obs_dim), act: (B, act_dim) -> (mean, log_std), each (B, obs_dim)."""
    w1_t, b1_t, w2_t, b2_t, wh_t, bh_t, lo, hi = packed
    B = obs.shape[0]
    h1, in_dim = w1_t.shape
    h2 = w2_t.shape[0]
    out2 = wh_t.shape[0]          # 2 * out_dim
    out_dim = out2 // 2
    compute_dtype = w1_t.dtype

    # Single merged input stream, feature-major: (in_dim, B).
    x_t = jnp.concatenate([obs, act], axis=-1).astype(compute_dtype).T

    # Batch lives on the lane axis now: pad to a multiple of 128, pick a 128-multiple
    # tile, and keep >= 2 grid steps when the batch allows (v7x has 2 TensorCores).
    b_pad = ((B + 127) // 128) * 128
    tb = max(128, (min(tile_b, b_pad) // 128) * 128)
    if b_pad // tb < 2 and b_pad >= 256:
        tb = max(128, ((b_pad // 2) // 128) * 128)
    b_pad = ((b_pad + tb - 1) // tb) * tb
    if b_pad != B:
        x_t = jnp.pad(x_t, ((0, 0), (0, b_pad - B)))

    grid = (b_pad // tb,)

    def col_spec(rows):
        # lane-dense, batch-tiled activations / output
        return pl.BlockSpec((rows, tb), lambda i: (0, i))

    def resident(shape):
        # same block index every grid step -> stays VMEM-resident
        return pl.BlockSpec(shape, lambda i: (0, 0))

    out_t = pl.pallas_call(
        _transition_kernel,
        out_shape=jax.ShapeDtypeStruct((out2, b_pad), jnp.float32),
        grid=grid,
        in_specs=[
            col_spec(in_dim),
            resident((h1, in_dim)), resident((h1, 1)),
            resident((h2, h1)), resident((h2, 1)),
            resident((out2, h2)), resident((out2, 1)),
            resident((out2, 1)), resident((out2, 1)),
        ],
        out_specs=col_spec(out2),
        compiler_params=pltpu.CompilerParams(dimension_semantics=("parallel",)),
    )(x_t, w1_t, b1_t, w2_t, b2_t, wh_t, bh_t, lo, hi)

    mean = out_t[:out_dim, :B].T
    log_std = out_t[out_dim:, :B].T
    return mean, log_std


def init_params(key, obs_dim, act_dim, hidden_dims):
    """Deterministic synthetic init (not a checkpoint load); mirrors torch Linear init."""
    in_dim = obs_dim + act_dim
    h1, h2 = hidden_dims
    keys = jax.random.split(key, 4)

    def lin(k, fan_in, fan_out):
        bound = 1.0 / jnp.sqrt(float(fan_in))
        kw, kb = jax.random.split(k)
        w = jax.random.uniform(kw, (fan_in, fan_out), jnp.float32, -bound, bound)
        b = jax.random.uniform(kb, (1, fan_out), jnp.float32, -bound, bound)
        return w, b

    w1, b1 = lin(keys[0], in_dim, h1)
    w2, b2 = lin(keys[1], h1, h2)
    wm, bm = lin(keys[2], h2, obs_dim)
    ws, bs = lin(keys[3], h2, obs_dim)
    return (w1, b1, w2, b2, wm, bm, ws, bs)


def reference_forward(obs, act, params):
    # Pure-JAX (f32) reference for sanity checks.
    x = jnp.concatenate([obs, act], axis=-1)
    w1, b1, w2, b2, wm, bm, ws, bs = params
    h = jnp.maximum(x @ w1 + b1, 0.0)
    h = jnp.maximum(h @ w2 + b2, 0.0)
    mean = h @ wm + bm
    log_std = jnp.clip(h @ ws + bs, LOG_STD_MIN, LOG_STD_MAX)
    return mean, log_std


if __name__ == "__main__":
    key = jax.random.PRNGKey(0)
    k_obs, k_act, k_par, k_obs2, k_act2 = jax.random.split(key, 5)

    # obs_shape=(16,), act_shape=(4,), hidden_dims=(32, 32)
    obs_dim, act_dim = 16, 4
    hidden_dims = (32, 32)
    params = init_params(k_par, obs_dim, act_dim, hidden_dims)

    # --- f32 path, batch = 8 (exact check vs. reference; single 128-lane tile) ---
    batch = 8
    obs = jax.random.normal(k_obs, (batch, obs_dim), jnp.float32)
    act = jax.random.normal(k_act, (batch, act_dim), jnp.float32)
    packed_f32 = pack_params(params, obs_dim, jnp.float32)

    mean, log_std = transition_forward(obs, act, packed_f32)
    mean = jax.block_until_ready(mean)
    log_std = jax.block_until_ready(log_std)

    ref_mean, ref_log_std = reference_forward(obs, act, params)
    assert mean.shape == (batch, obs_dim) and log_std.shape == (batch, obs_dim)
    assert jnp.allclose(mean, ref_mean, atol=1e-5, rtol=1e-5)
    assert jnp.allclose(log_std, ref_log_std, atol=1e-5, rtol=1e-5)

    # --- f32 path, ragged batch = 300 (exercises lane padding + multi-step grid) ---
    batch2 = 300
    obs2 = jax.random.normal(k_obs2, (batch2, obs_dim), jnp.float32)
    act2 = jax.random.normal(k_act2, (batch2, act_dim), jnp.float32)
    mean2, log_std2 = transition_forward(obs2, act2, packed_f32)
    mean2 = jax.block_until_ready(mean2)
    ref_mean2, ref_log_std2 = reference_forward(obs2, act2, params)
    assert mean2.shape == (batch2, obs_dim)
    assert jnp.allclose(mean2, ref_mean2, atol=1e-5, rtol=1e-5)
    assert jnp.allclose(log_std2, ref_log_std2, atol=1e-5, rtol=1e-5)

    # --- bf16 compute path (f32 accumulation): looser tolerance vs. f32 reference ---
    packed_bf16 = pack_params(params, obs_dim, jnp.bfloat16)
    mean3, log_std3 = transition_forward(obs, act, packed_bf16)
    mean3 = jax.block_until_ready(mean3)
    assert jnp.allclose(mean3, ref_mean, atol=5e-2, rtol=5e-2)
    assert jnp.allclose(log_std3, ref_log_std, atol=5e-2, rtol=5e-2)

    # TODO(synk): compute_loss (Normal.log_prob mean) not implemented; only forward() requested.
    print("KERNEL_OK")
</pallas_src>

<mosaic_0001>
module attributes {stable_mosaic.version = 11 : i64} {
  func.func @_transition_kernel(%arg0: i32, %arg1: memref<20x128xf32, #tpu.memory_space<vmem>>, %arg2: memref<32x20xf32, #tpu.memory_space<vmem>>, %arg3: memref<32x1xf32, #tpu.memory_space<vmem>>, %arg4: memref<32x32xf32, #tpu.memory_space<vmem>>, %arg5: memref<32x1xf32, #tpu.memory_space<vmem>>, %arg6: memref<32x32xf32, #tpu.memory_space<vmem>>, %arg7: memref<32x1xf32, #tpu.memory_space<vmem>>, %arg8: memref<32x1xf32, #tpu.memory_space<vmem>>, %arg9: memref<32x1xf32, #tpu.memory_space<vmem>>, %arg10: memref<32x128xf32, #tpu.memory_space<vmem>>) attributes {dimension_semantics = [#tpu.dimension_semantics<parallel>], iteration_bounds = array<i64: 1>, scalar_prefetch = 0 : i64, scratch_operands = 0 : i64, tpu.core_type = #tpu.core_type<tc>, window_params = [{transform_indices = @transform_0, window_bounds = array<i64: 20, 128>}, {pipeline_mode = #tpu.pipeline_mode<synchronous>, transform_indices = @transform_1, window_bounds = array<i64: 32, 20>}, {pipeline_mode = #tpu.pipeline_mode<synchronous>, transform_indices = @transform_2, window_bounds = array<i64: 32, 1>}, {pipeline_mode = #tpu.pipeline_mode<synchronous>, transform_indices = @transform_3, window_bounds = array<i64: 32, 32>}, {pipeline_mode = #tpu.pipeline_mode<synchronous>, transform_indices = @transform_4, window_bounds = array<i64: 32, 1>}, {pipeline_mode = #tpu.pipeline_mode<synchronous>, transform_indices = @transform_5, window_bounds = array<i64: 32, 32>}, {pipeline_mode = #tpu.pipeline_mode<synchronous>, transform_indices = @transform_6, window_bounds = array<i64: 32, 1>}, {pipeline_mode = #tpu.pipeline_mode<synchronous>, transform_indices = @transform_7, window_bounds = array<i64: 32, 1>}, {pipeline_mode = #tpu.pipeline_mode<synchronous>, transform_indices = @transform_8, window_bounds = array<i64: 32, 1>}, {transform_indices = @transform_9, window_bounds = array<i64: 32, 128>}]} {
    %c0 = arith.constant 0 : index
    %c0_0 = arith.constant 0 : index
    %0 = vector.load %arg2[%c0, %c0_0] : memref<32x20xf32, #tpu.memory_space<vmem>>, vector<32x20xf32>
    %c0_1 = arith.constant 0 : index
    %c0_2 = arith.constant 0 : index
    %1 = vector.load %arg1[%c0_1, %c0_2] : memref<20x128xf32, #tpu.memory_space<vmem>>, vector<20x128xf32>
    %cst = arith.constant dense<0.000000e+00> : vector<32x128xf32>
    %2 = tpu.matmul %0, %1, %cst {dimension_numbers = #tpu.dot_dimension_numbers<[1], [0], [0], [1], [0, 0, 1, 1], [], []>} : vector<32x20xf32>, vector<20x128xf32>, vector<32x128xf32> -> vector<32x128xf32>
    %c0_3 = arith.constant 0 : index
    %c0_4 = arith.constant 0 : index
    %3 = vector.load %arg3[%c0_3, %c0_4] : memref<32x1xf32, #tpu.memory_space<vmem>>, vector<32x1xf32>
    %4 = vector.broadcast %3 : vector<32x1xf32> to vector<32x128xf32>
    %5 = arith.addf %2, %4 : vector<32x128xf32>
    %cst_5 = arith.constant 0.000000e+00 : f32
    %6 = vector.broadcast %cst_5 : f32 to vector<32x128xf32>
    %7 = arith.maximumf %5, %6 : vector<32x128xf32>
    %c0_6 = arith.constant 0 : index
    %c0_7 = arith.constant 0 : index
    %8 = vector.load %arg4[%c0_6, %c0_7] : memref<32x32xf32, #tpu.memory_space<vmem>>, vector<32x32xf32>
    %cst_8 = arith.constant dense<0.000000e+00> : vector<32x128xf32>
    %9 = tpu.matmul %8, %7, %cst_8 {dimension_numbers = #tpu.dot_dimension_numbers<[1], [0], [0], [1], [0, 0, 1, 1], [], []>} : vector<32x32xf32>, vector<32x128xf32>, vector<32x128xf32> -> vector<32x128xf32>
    %c0_9 = arith.constant 0 : index
    %c0_10 = arith.constant 0 : index
    %10 = vector.load %arg5[%c0_9, %c0_10] : memref<32x1xf32, #tpu.memory_space<vmem>>, vector<32x1xf32>
    %11 = vector.broadcast %10 : vector<32x1xf32> to vector<32x128xf32>
    %12 = arith.addf %9, %11 : vector<32x128xf32>
    %cst_11 = arith.constant 0.000000e+00 : f32
    %13 = vector.broadcast %cst_11 : f32 to vector<32x128xf32>
    %14 = arith.maximumf %12, %13 : vector<32x128xf32>
    %c0_12 = arith.constant 0 : index
    %c0_13 = arith.constant 0 : index
    %15 = vector.load %arg6[%c0_12, %c0_13] : memref<32x32xf32, #tpu.memory_space<vmem>>, vector<32x32xf32>
    %cst_14 = arith.constant dense<0.000000e+00> : vector<32x128xf32>
    %16 = tpu.matmul %15, %14, %cst_14 {dimension_numbers = #tpu.dot_dimension_numbers<[1], [0], [0], [1], [0, 0, 1, 1], [], []>} : vector<32x32xf32>, vector<32x128xf32>, vector<32x128xf32> -> vector<32x128xf32>
    %c0_15 = arith.constant 0 : index
    %c0_16 = arith.constant 0 : index
    %17 = vector.load %arg7[%c0_15, %c0_16] : memref<32x1xf32, #tpu.memory_space<vmem>>, vector<32x1xf32>
    %18 = vector.broadcast %17 : vector<32x1xf32> to vector<32x128xf32>
    %19 = arith.addf %16, %18 : vector<32x128xf32>
    %c0_17 = arith.constant 0 : index
    %c0_18 = arith.constant 0 : index
    %20 = vector.load %arg8[%c0_17, %c0_18] : memref<32x1xf32, #tpu.memory_space<vmem>>, vector<32x1xf32>
    %21 = vector.broadcast %20 : vector<32x1xf32> to vector<32x128xf32>
    %22 = arith.maximumf %19, %21 : vector<32x128xf32>
    %c0_19 = arith.constant 0 : index
    %c0_20 = arith.constant 0 : index
    %23 = vector.load %arg9[%c0_19, %c0_20] : memref<32x1xf32, #tpu.memory_space<vmem>>, vector<32x1xf32>
    %24 = vector.broadcast %23 : vector<32x1xf32> to vector<32x128xf32>
    %25 = arith.minimumf %22, %24 : vector<32x128xf32>
    %c0_21 = arith.constant 0 : index
    %c0_22 = arith.constant 0 : index
    %26 = vector.load %arg10[%c0_21, %c0_22] : memref<32x128xf32, #tpu.memory_space<vmem>>, vector<32x128xf32>
    tpu.vector_store %arg10[%c0_21, %c0_22], %25 {strides = array<i32>} : memref<32x128xf32, #tpu.memory_space<vmem>>, vector<32x128xf32>,
    return
  }
  func.func @transform_0(%arg0: i32) -> (i32, i32) {
    %c0_i32 = arith.constant 0 : i32
    %c0_i32_0 = arith.constant 0 : i32
    return %c0_i32, %arg0 : i32, i32
  }
  func.func @transform_1(%arg0: i32) -> (i32, i32) {
    %c0_i32 = arith.constant 0 : i32
    %c0_i32_0 = arith.constant 0 : i32
    %c0_i32_1 = arith.constant 0 : i32
    return %c0_i32, %c0_i32_0 : i32, i32
  }
  func.func @transform_2(%arg0: i32) -> (i32, i32) {
    %c0_i32 = arith.constant 0 : i32
    %c0_i32_0 = arith.constant 0 : i32
    %c0_i32_1 = arith.constant 0 : i32
    return %c0_i32, %c0_i32_0 : i32, i32
  }
  func.func @transform_3(%arg0: i32) -> (i32, i32) {
    %c0_i32 = arith.constant 0 : i32
    %c0_i32_0 = arith.constant 0 : i32
    %c0_i32_1 = arith.constant 0 : i32
    return %c0_i32, %c0_i32_0 : i32, i32
  }
  func.func @transform_4(%arg0: i32) -> (i32, i32) {
    %c0_i32 = arith.constant 0 : i32
    %c0_i32_0 = arith.constant 0 : i32
    %c0_i32_1 = arith.constant 0 : i32
    return %c0_i32, %c0_i32_0 : i32, i32
  }
  func.func @transform_5(%arg0: i32) -> (i32, i32) {
    %c0_i32 = arith.constant 0 : i32
    %c0_i32_0 = arith.constant 0 : i32
    %c0_i32_1 = arith.constant 0 : i32
    return %c0_i32, %c0_i32_0 : i32, i32
  }
  func.func @transform_6(%arg0: i32) -> (i32, i32) {
    %c0_i32 = arith.constant 0 : i32
    %c0_i32_0 = arith.constant 0 : i32
    %c0_i32_1 = arith.constant 0 : i32
    return %c0_i32, %c0_i32_0 : i32, i32
  }
  func.func @transform_7(%arg0: i32) -> (i32, i32) {
    %c0_i32 = arith.constant 0 : i32
    %c0_i32_0 = arith.constant 0 : i32
    %c0_i32_1 = arith.constant 0 : i32
    return %c0_i32, %c0_i32_0 : i32, i32
  }
  func.func @transform_8(%arg0: i32) -> (i32, i32) {
    %c0_i32 = arith.constant 0 : i32
    %c0_i32_0 = arith.constant 0 : i32
    %c0_i32_1 = arith.constant 0 : i32
    return %c0_i32, %c0_i32_0 : i32, i32
  }
  func.func @transform_9(%arg0: i32) -> (i32, i32) {
    %c0_i32 = arith.constant 0 : i32
    %c0_i32_0 = arith.constant 0 : i32
    return %c0_i32, %arg0 : i32, i32
  }
}

</mosaic_0001>

<llo_original>
// kernel: transition_forward.1
$region0: #{transition_forward.1}
  #allocation0 [shape = 'u32[]', space=smem, size = 0x4, offset = 0x4, fixed_abs, tag = 'smem constant byte address 0x4 - core index']
  #allocation1 [shape = 'u32[144,128]{1,0:T(1,128)}', space=vmem, size = 0x12000, scoped, tag = 'internal scratch']
  %s0 = inlined_call_operand.vmem [shape: f32[20,128], index: 0, kind: input, shape index: {}]
  %s1 = inlined_call_operand.vmem [shape: f32[32,20], index: 1, kind: input, shape index: {}]
  %s2 = inlined_call_operand.vmem [shape: f32[32,1], index: 2, kind: input, shape index: {}]
  %s3 = inlined_call_operand.vmem [shape: f32[32,32], index: 3, kind: input, shape index: {}]
  %s4 = inlined_call_operand.vmem [shape: f32[32,1], index: 4, kind: input, shape index: {}]
  %s5 = inlined_call_operand.vmem [shape: f32[32,32], index: 5, kind: input, shape index: {}]
  %s6 = inlined_call_operand.vmem [shape: f32[32,1], index: 6, kind: input, shape index: {}]
  %s7 = inlined_call_operand.vmem [shape: f32[32,1], index: 7, kind: input, shape index: {}]
  %s8 = inlined_call_operand.vmem [shape: f32[32,1], index: 8, kind: input, shape index: {}]
  %s9 = inlined_call_operand.vmem [shape: f32[32,128], index: 9, kind: output, shape index: {}]
  %s10 = sld [smem:[#allocation0]]
  $region46: #{transition_forward.1} parent=0
    _
  %s12 = ssub.s32 1, %s10
  %s13 = scalar_select 0, %s12, %s10
  // Predicated region
  $region2: #{transition_forward.1} parent=0 // pred_check
    _
  $region3: #{transition_forward.1} parent=0 // pred_check_branch
    %15 = sbr.rel (0) target = $region5
  $region4: #{transition_forward.1} parent=0 // pred_region
    _
  $region5: #{transition_forward.1} parent=0 // pred_fallthru
    _
  // Predicated region
  $region6: #{transition_forward.1} parent=0 // pred_check
    _
  $region7: #{transition_forward.1} parent=0 // pred_check_branch
    %17 = sbr.rel (0) target = $region9
  $region8: #{transition_forward.1} parent=0 // pred_region
    _
  $region9: #{transition_forward.1} parent=0 // pred_fallthru
    _
  // Predicated region
  $region10: #{transition_forward.1} parent=0 // pred_check
    _
  $region11: #{transition_forward.1} parent=0 // pred_check_branch
    %19 = sbr.rel (0) target = $region13
  $region12: #{transition_forward.1} parent=0 // pred_region
    _
  $region13: #{transition_forward.1} parent=0 // pred_fallthru
    _
  // Predicated region
  $region14: #{transition_forward.1} parent=0 // pred_check
    _
  $region15: #{transition_forward.1} parent=0 // pred_check_branch
    %21 = sbr.rel (0) target = $region17
  $region16: #{transition_forward.1} parent=0 // pred_region
    _
  $region17: #{transition_forward.1} parent=0 // pred_fallthru
    _
  // Predicated region
  $region18: #{transition_forward.1} parent=0 // pred_check
    _
  $region19: #{transition_forward.1} parent=0 // pred_check_branch
    %23 = sbr.rel (0) target = $region21
  $region20: #{transition_forward.1} parent=0 // pred_region
    _
  $region21: #{transition_forward.1} parent=0 // pred_fallthru
    _
  // Predicated region
  $region22: #{transition_forward.1} parent=0 // pred_check
    _
  $region23: #{transition_forward.1} parent=0 // pred_check_branch
    %25 = sbr.rel (0) target = $region25
  $region24: #{transition_forward.1} parent=0 // pred_region
    _
  $region25: #{transition_forward.1} parent=0 // pred_fallthru
    _
  // Predicated region
  $region26: #{transition_forward.1} parent=0 // pred_check
    _
  $region27: #{transition_forward.1} parent=0 // pred_check_branch
    %27 = sbr.rel (0) target = $region29
  $region28: #{transition_forward.1} parent=0 // pred_region
    _
  $region29: #{transition_forward.1} parent=0 // pred_fallthru
    _
  // Predicated region
  $region30: #{transition_forward.1} parent=0 // pred_check
    _
  $region31: #{transition_forward.1} parent=0 // pred_check_branch
    %29 = sbr.rel (0) target = $region33
  $region32: #{transition_forward.1} parent=0 // pred_region
    _
  $region33: #{transition_forward.1} parent=0 // pred_fallthru
    _
  // Predicated region
  $region34: #{transition_forward.1} parent=0 // pred_check
    _
  $region35: #{transition_forward.1} parent=0 // pred_check_branch
    %31 = sbr.rel (0) target = $region37
  $region36: #{transition_forward.1} parent=0 // pred_region
    _
  $region37: #{transition_forward.1} parent=0 // pred_fallthru
    _
  %v32 = vld [vmem:[%s1] sm:$0xff]
  %v33 = vld [vmem:[%s1 + $0x8] sm:$0xff]
  %v34 = vld [vmem:[%s1 + $0x10] sm:$0xff]
  %v35 = vld [vmem:[%s1 + $0x18] sm:$0xff]
  %v36 = vld [vmem:[%s0] sm:$0xff]
  %v37 = vld [vmem:[%s0 + $0x8] sm:$0xff]
  %v38 = vld [vmem:[%s0 + $0x10] sm:$0xf]
  %v39 = vld [vmem:[%s2] sm:$0xff]
  %v40 = vld [vmem:[%s2 + $0x8] sm:$0xff]
  %v41 = vld [vmem:[%s2 + $0x10] sm:$0xff]
  %v42 = vld [vmem:[%s2 + $0x18] sm:$0xff]
  %44 = vset.pattern.permute.xlu0 0
  %45 = vperm.xlu0 %44, %v39
  %v46 = vpop.permute.xlu0 %45
  %49 = vset.pattern.permute.xlu0 0
  %50 = vperm.xlu0 %49, %v40
  %v51 = vpop.permute.xlu0 %50
  %54 = vset.pattern.permute.xlu0 0
  %55 = vperm.xlu0 %54, %v41
  %v56 = vpop.permute.xlu0 %55
  %59 = vset.pattern.permute.xlu0 0
  %60 = vperm.xlu0 %59, %v42
  %v61 = vpop.permute.xlu0 %60
  %vm63 = vcmask 162816
  %v65 = vsel %vm63, %v32, 0
  %v68 = vsel %vm63, %v33, 0
  %v71 = vsel %vm63, %v34, 0
  %v74 = vsel %vm63, %v35, 0
  %vm76 = vcmask 1043456
  %v78 = vsel %vm76, %v38, 0
  %80 = vmatprep.subr.mxu0 0.0
  %81 = vmatpush1.msra.mxu0 %v36
  %82 = vmatprep.subr.mxu0 0.0
  %83 = vmatpush1.msra.mxu0 %v37
  %84 = vmatprep.subr.mxu0 0.0
  %85 = vmatpush1.msra.mxu0 %v78
  %86 = vmatprep.subr.mxu0 0.0
  %87 = vmatpush1.msra.mxu0 0.0
  %88 = vmatprep.subr.mxu0 0.0
  %89 = vmatpush1.msra.mxu0 0.0
  %90 = vmatprep.subr.mxu0 0.0
  %91 = vmatpush1.msra.mxu0 0.0
  %92 = vmatprep.subr.mxu0 0.0
  %93 = vmatpush1.msra.mxu0 0.0
  %94 = vmatprep.subr.mxu0 0.0
  %95 = vmatpush1.msra.mxu0 0.0
  %96 = vmatprep.subr.mxu0 0.0
  %97 = vmatpush1.msra.mxu0 0.0
  %98 = vmatprep.subr.mxu0 0.0
  %99 = vmatpush1.msra.mxu0 0.0
  %100 = vmatprep.subr.mxu0 0.0
  %101 = vmatpush1.msra.mxu0 0.0
  %102 = vmatprep.subr.mxu0 0.0
  %103 = vmatpush1.msra.mxu0 0.0
  %104 = vmatprep.subr.mxu0 0.0
  %105 = vmatpush1.msra.mxu0 0.0
  %106 = vmatprep.subr.mxu0 0.0
  %107 = vmatpush1.msra.mxu0 0.0
  %108 = vmatprep.subr.mxu0 0.0
  %109 = vmatpush1.msra.mxu0 0.0
  %110 = vmatprep.subr.mxu0 0.0
  %111 = vmatpush1.msra.mxu0 0.0
  %112 = vmatprep.subr.mxu0 0.0
  %113 = vmatpush1.msra.mxu0 0.0
  %114 = vmatprep.subr.mxu0 0.0
  %115 = vmatpush1.msra.mxu0 0.0
  %116 = vmatprep.subr.mxu0 0.0
  %117 = vmatpush1.msra.mxu0 0.0
  %118 = vmatprep.subr.mxu0 0.0
  %119 = vmatpush1.msra.mxu0 0.0
  %120 = vmatprep.subr.mxu0 0.0
  %121 = vmatpush1.msra.mxu0 0.0
  %122 = vmatprep.subr.mxu0 0.0
  %123 = vmatpush1.msra.mxu0 0.0
  %124 = vmatprep.subr.mxu0 0.0
  %125 = vmatpush1.msra.mxu0 0.0
  %126 = vmatprep.subr.mxu0 0.0
  %127 = vmatpush1.msra.mxu0 0.0
  %128 = vmatprep.subr.mxu0 0.0
  %129 = vmatpush1.msra.mxu0 0.0
  %130 = vmatprep.subr.mxu0 0.0
  %131 = vmatpush1.msra.mxu0 0.0
  %132 = vmatprep.subr.mxu0 0.0
  %133 = vmatpush1.msra.mxu0 0.0
  %134 = vmatprep.subr.mxu0 0.0
  %135 = vmatpush1.msra.mxu0 0.0
  %136 = vmatprep.subr.mxu0 0.0
  %137 = vmatpush1.msra.mxu0 0.0
  %138 = vmatprep.subr.mxu0 0.0
  %139 = vmatpush1.msra.mxu0 0.0
  %140 = vmatprep.subr.mxu0 0.0
  %141 = vmatpush1.msra.mxu0 0.0
  %142 = vmatprep.subr.mxu0 0.0
  %143 = vmatpush1.msra.mxu0 0.0
  %144 = vmatprep.mubr.f32.mxu0 0.0
  %145 = vmatmul.mubr.f32.gmra.mrb[0].mxu0 %v65
  %v146 = vpop.f32.mrb[0].mxu0
  %v147 = vadd.f32 %v46, %v146
  %v148 = vpop.f32.mrb[0].mxu0
  %149 = vmatprep.mubr.f32.mxu0 0.0
  %150 = vmatmul.mubr.f32.gmra.mrb[0].mxu0 %v68
  %v151 = vpop.f32.mrb[0].mxu0
  %v152 = vadd.f32 %v51, %v151
  %v153 = vpop.f32.mrb[0].mxu0
  %154 = vmatprep.mubr.f32.mxu0 0.0
  %155 = vmatmul.mubr.f32.gmra.mrb[0].mxu0 %v71
  %v156 = vpop.f32.mrb[0].mxu0
  %v157 = vadd.f32 %v56, %v156
  %v158 = vpop.f32.mrb[0].mxu0
  %159 = vmatprep.mubr.f32.mxu0 0.0
  %160 = vmatmul.mubr.f32.gmra.mrb[0].mxu0 %v74
  %v161 = vpop.f32.mrb[0].mxu0
  %v162 = vadd.f32 %v61, %v161
  %v163 = vpop.f32.mrb[0].mxu0
  %164 = vdwg.mxu0
  %v165 = vmax.f32 %v147, 0.0
  %v166 = vmax.f32 %v152, 0.0
  %v167 = vmax.f32 %v157, 0.0
  %v168 = vmax.f32 %v162, 0.0
  %v169 = vld [vmem:[%s3] sm:$0xff]
  %v170 = vld [vmem:[%s3 + $0x8] sm:$0xff]
  %v171 = vld [vmem:[%s3 + $0x10] sm:$0xff]
  %v172 = vld [vmem:[%s3 + $0x18] sm:$0xff]
  %v173 = vld [vmem:[%s4] sm:$0xff]
  %v174 = vld [vmem:[%s4 + $0x8] sm:$0xff]
  %v175 = vld [vmem:[%s4 + $0x10] sm:$0xff]
  %v176 = vld [vmem:[%s4 + $0x18] sm:$0xff]
  %178 = vset.pattern.permute.xlu0 0
  %179 = vperm.xlu0 %178, %v173
  %v180 = vpop.permute.xlu0 %179
  %183 = vset.pattern.permute.xlu0 0
  %184 = vperm.xlu0 %183, %v174
  %v185 = vpop.permute.xlu0 %184
  %188 = vset.pattern.permute.xlu0 0
  %189 = vperm.xlu0 %188, %v175
  %v190 = vpop.permute.xlu0 %189
  %193 = vset.pattern.permute.xlu0 0
  %194 = vperm.xlu0 %193, %v176
  %v195 = vpop.permute.xlu0 %194
  %vm197 = vcmask 261120
  %v199 = vsel %vm197, %v169, 0
  %v202 = vsel %vm197, %v170, 0
  %v205 = vsel %vm197, %v171, 0
  %v208 = vsel %vm197, %v172, 0
  %210 = vmatprep.subr.mxu0 0.0
  %211 = vmatpush1.msra.mxu0 %v165
  %212 = vmatprep.subr.mxu0 0.0
  %213 = vmatpush1.msra.mxu0 %v166
  %214 = vmatprep.subr.mxu0 0.0
  %215 = vmatpush1.msra.mxu0 %v167
  %216 = vmatprep.subr.mxu0 0.0
  %217 = vmatpush1.msra.mxu0 %v168
  %218 = vmatprep.subr.mxu0 0.0
  %219 = vmatpush1.msra.mxu0 0.0
  %220 = vmatprep.subr.mxu0 0.0
  %221 = vmatpush1.msra.mxu0 0.0
  %222 = vmatprep.subr.mxu0 0.0
  %223 = vmatpush1.msra.mxu0 0.0
  %224 = vmatprep.subr.mxu0 0.0
  %225 = vmatpush1.msra.mxu0 0.0
  %226 = vmatprep.subr.mxu0 0.0
  %227 = vmatpush1.msra.mxu0 0.0
  %228 = vmatprep.subr.mxu0 0.0
  %229 = vmatpush1.msra.mxu0 0.0
  %230 = vmatprep.subr.mxu0 0.0
  %231 = vmatpush1.msra.mxu0 0.0
  %232 = vmatprep.subr.mxu0 0.0
  %233 = vmatpush1.msra.mxu0 0.0
  %234 = vmatprep.subr.mxu0 0.0
  %235 = vmatpush1.msra.mxu0 0.0
  %236 = vmatprep.subr.mxu0 0.0
  %237 = vmatpush1.msra.mxu0 0.0
  %238 = vmatprep.subr.mxu0 0.0
  %239 = vmatpush1.msra.mxu0 0.0
  %240 = vmatprep.subr.mxu0 0.0
  %241 = vmatpush1.msra.mxu0 0.0
  %242 = vmatprep.subr.mxu0 0.0
  %243 = vmatpush1.msra.mxu0 0.0
  %244 = vmatprep.subr.mxu0 0.0
  %245 = vmatpush1.msra.mxu0 0.0
  %246 = vmatprep.subr.mxu0 0.0
  %247 = vmatpush1.msra.mxu0 0.0
  %248 = vmatprep.subr.mxu0 0.0
  %249 = vmatpush1.msra.mxu0 0.0
  %250 = vmatprep.subr.mxu0 0.0
  %251 = vmatpush1.msra.mxu0 0.0
  %252 = vmatprep.subr.mxu0 0.0
  %253 = vmatpush1.msra.mxu0 0.0
  %254 = vmatprep.subr.mxu0 0.0
  %255 = vmatpush1.msra.mxu0 0.0
  %256 = vmatprep.subr.mxu0 0.0
  %257 = vmatpush1.msra.mxu0 0.0
  %258 = vmatprep.subr.mxu0 0.0
  %259 = vmatpush1.msra.mxu0 0.0
  %260 = vmatprep.subr.mxu0 0.0
  %261 = vmatpush1.msra.mxu0 0.0
  %262 = vmatprep.subr.mxu0 0.0
  %263 = vmatpush1.msra.mxu0 0.0
  %264 = vmatprep.subr.mxu0 0.0
  %265 = vmatpush1.msra.mxu0 0.0
  %266 = vmatprep.subr.mxu0 0.0
  %267 = vmatpush1.msra.mxu0 0.0
  %268 = vmatprep.subr.mxu0 0.0
  %269 = vmatpush1.msra.mxu0 0.0
  %270 = vmatprep.subr.mxu0 0.0
  %271 = vmatpush1.msra.mxu0 0.0
  %272 = vmatprep.subr.mxu0 0.0
  %273 = vmatpush1.msra.mxu0 0.0
  %274 = vmatprep.mubr.f32.mxu0 0.0
  %275 = vmatmul.mubr.f32.gmra.mrb[0].mxu0 %v199
  %v276 = vpop.f32.mrb[0].mxu0
  %v277 = vadd.f32 %v180, %v276
  %v278 = vpop.f32.mrb[0].mxu0
  %279 = vmatprep.mubr.f32.mxu0 0.0
  %280 = vmatmul.mubr.f32.gmra.mrb[0].mxu0 %v202
  %v281 = vpop.f32.mrb[0].mxu0
  %v282 = vadd.f32 %v185, %v281
  %v283 = vpop.f32.mrb[0].mxu0
  %284 = vmatprep.mubr.f32.mxu0 0.0
  %285 = vmatmul.mubr.f32.gmra.mrb[0].mxu0 %v205
  %v286 = vpop.f32.mrb[0].mxu0
  %v287 = vadd.f32 %v190, %v286
  %v288 = vpop.f32.mrb[0].mxu0
  %289 = vmatprep.mubr.f32.mxu0 0.0
  %290 = vmatmul.mubr.f32.gmra.mrb[0].mxu0 %v208
  %v291 = vpop.f32.mrb[0].mxu0
  %v292 = vadd.f32 %v195, %v291
  %v293 = vpop.f32.mrb[0].mxu0
  %294 = vdwg.mxu0
  %v295 = vmax.f32 %v277, 0.0
  %v296 = vmax.f32 %v282, 0.0
  %v297 = vmax.f32 %v287, 0.0
  %v298 = vmax.f32 %v292, 0.0
  %v299 = vld [vmem:[%s5] sm:$0xff]
  %v300 = vld [vmem:[%s5 + $0x8] sm:$0xff]
  %v301 = vld [vmem:[%s5 + $0x10] sm:$0xff]
  %v302 = vld [vmem:[%s5 + $0x18] sm:$0xff]
  %v303 = vld [vmem:[%s6] sm:$0xff]
  %v304 = vld [vmem:[%s6 + $0x8] sm:$0xff]
  %v305 = vld [vmem:[%s6 + $0x10] sm:$0xff]
  %v306 = vld [vmem:[%s6 + $0x18] sm:$0xff]
  %308 = vset.pattern.permute.xlu0 0
  %309 = vperm.xlu0 %308, %v303
  %v310 = vpop.permute.xlu0 %309
  %313 = vset.pattern.permute.xlu0 0
  %314 = vperm.xlu0 %313, %v304
  %v315 = vpop.permute.xlu0 %314
  %318 = vset.pattern.permute.xlu0 0
  %319 = vperm.xlu0 %318, %v305
  %v320 = vpop.permute.xlu0 %319
  %323 = vset.pattern.permute.xlu0 0
  %324 = vperm.xlu0 %323, %v306
  %v325 = vpop.permute.xlu0 %324
  %v328 = vsel %vm197, %v299, 0
  %v331 = vsel %vm197, %v300, 0
  %v334 = vsel %vm197, %v301, 0
  %v337 = vsel %vm197, %v302, 0
  %339 = vmatprep.subr.mxu0 0.0
  %340 = vmatpush1.msra.mxu0 %v295
  %341 = vmatprep.subr.mxu0 0.0
  %342 = vmatpush1.msra.mxu0 %v296
  %343 = vmatprep.subr.mxu0 0.0
  %344 = vmatpush1.msra.mxu0 %v297
  %345 = vmatprep.subr.mxu0 0.0
  %346 = vmatpush1.msra.mxu0 %v298
  %347 = vmatprep.subr.mxu0 0.0
  %348 = vmatpush1.msra.mxu0 0.0
  %349 = vmatprep.subr.mxu0 0.0
  %350 = vmatpush1.msra.mxu0 0.0
  %351 = vmatprep.subr.mxu0 0.0
  %352 = vmatpush1.msra.mxu0 0.0
  %353 = vmatprep.subr.mxu0 0.0
  %354 = vmatpush1.msra.mxu0 0.0
  %355 = vmatprep.subr.mxu0 0.0
  %356 = vmatpush1.msra.mxu0 0.0
  %357 = vmatprep.subr.mxu0 0.0
  %358 = vmatpush1.msra.mxu0 0.0
  %359 = vmatprep.subr.mxu0 0.0
  %360 = vmatpush1.msra.mxu0 0.0
  %361 = vmatprep.subr.mxu0 0.0
  %362 = vmatpush1.msra.mxu0 0.0
  %363 = vmatprep.subr.mxu0 0.0
  %364 = vmatpush1.msra.mxu0 0.0
  %365 = vmatprep.subr.mxu0 0.0
  %366 = vmatpush1.msra.mxu0 0.0
  %367 = vmatprep.subr.mxu0 0.0
  %368 = vmatpush1.msra.mxu0 0.0
  %369 = vmatprep.subr.mxu0 0.0
  %370 = vmatpush1.msra.mxu0 0.0
  %371 = vmatprep.subr.mxu0 0.0
  %372 = vmatpush1.msra.mxu0 0.0
  %373 = vmatprep.subr.mxu0 0.0
  %374 = vmatpush1.msra.mxu0 0.0
  %375 = vmatprep.subr.mxu0 0.0
  %376 = vmatpush1.msra.mxu0 0.0
  %377 = vmatprep.subr.mxu0 0.0
  %378 = vmatpush1.msra.mxu0 0.0
  %379 = vmatprep.subr.mxu0 0.0
  %380 = vmatpush1.msra.mxu0 0.0
  %381 = vmatprep.subr.mxu0 0.0
  %382 = vmatpush1.msra.mxu0 0.0
  %383 = vmatprep.subr.mxu0 0.0
  %384 = vmatpush1.msra.mxu0 0.0
  %385 = vmatprep.subr.mxu0 0.0
  %386 = vmatpush1.msra.mxu0 0.0
  %387 = vmatprep.subr.mxu0 0.0
  %388 = vmatpush1.msra.mxu0 0.0
  %389 = vmatprep.subr.mxu0 0.0
  %390 = vmatpush1.msra.mxu0 0.0
  %391 = vmatprep.subr.mxu0 0.0
  %392 = vmatpush1.msra.mxu0 0.0
  %393 = vmatprep.subr.mxu0 0.0
  %394 = vmatpush1.msra.mxu0 0.0
  %395 = vmatprep.subr.mxu0 0.0
  %396 = vmatpush1.msra.mxu0 0.0
  %397 = vmatprep.subr.mxu0 0.0
  %398 = vmatpush1.msra.mxu0 0.0
  %399 = vmatprep.subr.mxu0 0.0
  %400 = vmatpush1.msra.mxu0 0.0
  %401 = vmatprep.subr.mxu0 0.0
  %402 = vmatpush1.msra.mxu0 0.0
  %403 = vmatprep.mubr.f32.mxu0 0.0
  %404 = vmatmul.mubr.f32.gmra.mrb[0].mxu0 %v328
  %v405 = vpop.f32.mrb[0].mxu0
  %v406 = vadd.f32 %v310, %v405
  %v407 = vpop.f32.mrb[0].mxu0
  %408 = vmatprep.mubr.f32.mxu0 0.0
  %409 = vmatmul.mubr.f32.gmra.mrb[0].mxu0 %v331
  %v410 = vpop.f32.mrb[0].mxu0
  %v411 = vadd.f32 %v315, %v410
  %v412 = vpop.f32.mrb[0].mxu0
  %413 = vmatprep.mubr.f32.mxu0 0.0
  %414 = vmatmul.mubr.f32.gmra.mrb[0].mxu0 %v334
  %v415 = vpop.f32.mrb[0].mxu0
  %v416 = vadd.f32 %v320, %v415
  %v417 = vpop.f32.mrb[0].mxu0
  %418 = vmatprep.mubr.f32.mxu0 0.0
  %419 = vmatmul.mubr.f32.gmra.mrb[0].mxu0 %v337
  %v420 = vpop.f32.mrb[0].mxu0
  %v421 = vadd.f32 %v325, %v420
  %v422 = vpop.f32.mrb[0].mxu0
  %423 = vdwg.mxu0
  %v424 = vld [vmem:[%s7] sm:$0xff]
  %v425 = vld [vmem:[%s7 + $0x8] sm:$0xff]
  %v426 = vld [vmem:[%s7 + $0x10] sm:$0xff]
  %v427 = vld [vmem:[%s7 + $0x18] sm:$0xff]
  %429 = vset.pattern.permute.xlu0 0
  %430 = vperm.xlu0 %429, %v424
  %v431 = vpop.permute.xlu0 %430
  %434 = vset.pattern.permute.xlu0 0
  %435 = vperm.xlu0 %434, %v425
  %v436 = vpop.permute.xlu0 %435
  %439 = vset.pattern.permute.xlu0 0
  %440 = vperm.xlu0 %439, %v426
  %v441 = vpop.permute.xlu0 %440
  %444 = vset.pattern.permute.xlu0 0
  %445 = vperm.xlu0 %444, %v427
  %v446 = vpop.permute.xlu0 %445
  %v448 = vmax.f32 %v406, %v431
  %v449 = vmax.f32 %v411, %v436
  %v450 = vmax.f32 %v416, %v441
  %v451 = vmax.f32 %v421, %v446
  %v452 = vld [vmem:[%s8] sm:$0xff]
  %v453 = vld [vmem:[%s8 + $0x8] sm:$0xff]
  %v454 = vld [vmem:[%s8 + $0x10] sm:$0xff]
  %v455 = vld [vmem:[%s8 + $0x18] sm:$0xff]
  %457 = vset.pattern.permute.xlu0 0
  %458 = vperm.xlu0 %457, %v452
  %v459 = vpop.permute.xlu0 %458
  %462 = vset.pattern.permute.xlu0 0
  %463 = vperm.xlu0 %462, %v453
  %v464 = vpop.permute.xlu0 %463
  %467 = vset.pattern.permute.xlu0 0
  %468 = vperm.xlu0 %467, %v454
  %v469 = vpop.permute.xlu0 %468
  %472 = vset.pattern.permute.xlu0 0
  %473 = vperm.xlu0 %472, %v455
  %v474 = vpop.permute.xlu0 %473
  %v476 = vmin.f32 %v448, %v459
  %v477 = vmin.f32 %v449, %v464
  %v478 = vmin.f32 %v450, %v469
  %v479 = vmin.f32 %v451, %v474
  %480 = vst [vmem:[%s9] sm:$0xff] %v476
  %481 = vst [vmem:[%s9 + $0x8] sm:$0xff] %v477
  %482 = vst [vmem:[%s9 + $0x10] sm:$0xff] %v478
  %483 = vst [vmem:[%s9 + $0x18] sm:$0xff] %v479
  // Predicated region
  $region38: #{transition_forward.1} parent=0 // pred_check
    _
  $region39: #{transition_forward.1} parent=0 // pred_check_branch
    %485 = sbr.rel (0) target = $region41
  $region40: #{transition_forward.1} parent=0 // pred_region
    _
  $region41: #{transition_forward.1} parent=0 // pred_fallthru
    _
  // Predicated region
  $region42: #{transition_forward.1} parent=0 // pred_check
    _
  $region43: #{transition_forward.1} parent=0 // pred_check_branch
    %487 = sbr.rel (0) target = $region45
  $region44: #{transition_forward.1} parent=0 // pred_region
    _
  $region45: #{transition_forward.1} parent=0 // pred_fallthru
    _

</llo_original>
